<compile_context>
chip_gen: v5e
topology: v5e:2x2
jax: 0.10.0
libtpu: 0.0.40
codegen_flags: <defaults>
</compile_context>

<pallas_src>
import functools

import jax
import jax.numpy as jnp
from jax.experimental import pallas as pl
from jax.experimental.pallas import tpu as pltpu

HIDDEN = 128      # fc1/fc2 width from the module
NOUT_PAD = 8      # fc3's single output row, padded to 8 sublanes (row 0 is real)
LANE = 128        # batch lives on the lane axis -> tiles are multiples of 128


def _num_tensorcores():
    """Best-effort detection of TensorCores per chip (v7x has 2)."""
    try:
        kind = jax.devices()[0].device_kind.lower()
        if "v7" in kind or "7x" in kind:
            return 2
    except Exception:
        pass
    return 1


NUM_TC = _num_tensorcores()
# Single-TC parts (v5e/v6e): one big tile (fewer grid steps). v7x: smaller cap, and
# the tiling below forces >= NUM_TC tiles so both cores get work.
DEFAULT_MAX_TB = 1024 if NUM_TC > 1 else 4096


def _cdiv(a, b):
    return (a + b - 1) // b


def _round_up(a, b):
    return _cdiv(a, b) * b


def _critic_kernel(x_ref, w1_ref, b1_ref, w2_ref, b2_ref, w3_ref, b3_ref, o_ref):
    """Feature-major tile: o = W3ᵀ-row0 applied to relu(W2ᵀ relu(W1ᵀ x + b1) + b2) + b3.

    x_ref: (state_dim, tb)  -- batch on the lane axis (tb % 128 == 0 -> unmasked stores)
    W*_ref: pre-transposed (fan_out, fan_in); biases (fan_out, 1) in f32.
    MXU accumulates in f32; bias-add / ReLU run in f32 on the VPU.
    """
    cdt = w1_ref.dtype
    h1 = jnp.dot(w1_ref[...], x_ref[...], preferred_element_type=jnp.float32)   # (HIDDEN, tb)
    h1 = jnp.maximum(h1 + b1_ref[...], 0.0)
    h2 = jnp.dot(w2_ref[...], h1.astype(cdt), preferred_element_type=jnp.float32)
    h2 = jnp.maximum(h2 + b2_ref[...], 0.0)
    o = jnp.dot(w3_ref[...], h2.astype(cdt), preferred_element_type=jnp.float32) + b3_ref[...]
    o_ref[...] = o.astype(o_ref.dtype)                                           # (NOUT_PAD, tb)


def init_params(key, state_dim):
    """PyTorch-default-style uniform(-1/sqrt(fan_in), 1/sqrt(fan_in)) init.
    Weights stored [in, out] (transposed vs. PyTorch) so references compute x @ W + b."""
    ks = jax.random.split(key, 6)

    def lin(kw, kb, fan_in, fan_out):
        bound = 1.0 / jnp.sqrt(jnp.float32(fan_in))
        w = jax.random.uniform(kw, (fan_in, fan_out), jnp.float32, -bound, bound)
        b = jax.random.uniform(kb, (fan_out,), jnp.float32, -bound, bound)
        return w, b

    w1, b1 = lin(ks[0], ks[1], state_dim, HIDDEN)
    w2, b2 = lin(ks[2], ks[3], HIDDEN, HIDDEN)
    w3, b3 = lin(ks[4], ks[5], HIDDEN, 1)
    return (w1, b1, w2, b2, w3, b3)


def prepare_params(params, param_dtype=jnp.bfloat16):
    """ONE-TIME layout prep (hoisted out of the per-step forward).

    - Weights stored transposed (fan_out, fan_in) so the kernel runs feature-major
      with the batch on the lane axis (lane-dense loads/stores, no masked vst).
    - fc3 output padded to NOUT_PAD sublanes; only row 0 is real and the zero-filled
      padding keeps rows 1..7 exactly zero (invariant relied on by the final slice).
    - Weights default to bf16 (half the weight DMA, cheaper MXU passes; biggest
      relative win on v5e). Biases stay f32.
    """
    w1, b1, w2, b2, w3, b3 = params
    w1_p = w1.T.astype(param_dtype)                                   # (HIDDEN, state_dim)
    b1_p = b1.astype(jnp.float32).reshape(HIDDEN, 1)
    w2_p = w2.T.astype(param_dtype)                                   # (HIDDEN, HIDDEN)
    b2_p = b2.astype(jnp.float32).reshape(HIDDEN, 1)
    w3_p = jnp.zeros((NOUT_PAD, HIDDEN), param_dtype).at[:1, :].set(w3.T.astype(param_dtype))
    b3_p = jnp.zeros((NOUT_PAD, 1), jnp.float32).at[0, 0].set(b3[0].astype(jnp.float32))
    return (w1_p, b1_p, w2_p, b2_p, w3_p, b3_p)


@functools.partial(jax.jit, static_argnames=("max_tb",))
def critic_forward(x, prepped, max_tb=None):
    """Per-step forward: one fused layout op on x, then the batch-tiled pallas_call."""
    w1_p, b1_p, w2_p, b2_p, w3_p, b3_p = prepped
    cdt = w1_p.dtype
    B, state_dim = x.shape

    max_tb = DEFAULT_MAX_TB if max_tb is None else max_tb
    # Balanced batch tiling on the lane axis (tb is always a multiple of 128).
    bp128 = _round_up(max(B, 1), LANE)
    num_tiles = _cdiv(bp128, max_tb)
    if NUM_TC > 1 and bp128 >= 2 * LANE:
        num_tiles = max(num_tiles, NUM_TC)          # keep both v7x TensorCores busy
    tb = _round_up(_cdiv(bp128, num_tiles), LANE)
    bp = num_tiles * tb
    grid = (num_tiles,)

    # Single fused wrapper op: cast + transpose + pad into the kernel's feature-major
    # layout. (A rollout collector can emit observations in this layout and skip it.)
    x_fm = jnp.pad(x.astype(cdt).T, ((0, 0), (0, bp - B)))   # (state_dim, bp)

    flops = 2 * bp * (state_dim * HIDDEN + HIDDEN * HIDDEN + HIDDEN * NOUT_PAD)
    bytes_accessed = (
        x_fm.size * x_fm.dtype.itemsize
        + sum(int(p.size) * p.dtype.itemsize for p in prepped)
        + bp * NOUT_PAD * 4
    )

    out = pl.pallas_call(
        _critic_kernel,
        out_shape=jax.ShapeDtypeStruct((NOUT_PAD, bp), jnp.float32),
        grid=grid,
        in_specs=[
            pl.BlockSpec((state_dim, tb), lambda i: (0, i)),      # x: tiled along lanes (batch)
            pl.BlockSpec((HIDDEN, state_dim), lambda i: (0, 0)),  # W1ᵀ (grid-resident)
            pl.BlockSpec((HIDDEN, 1), lambda i: (0, 0)),          # b1
            pl.BlockSpec((HIDDEN, HIDDEN), lambda i: (0, 0)),     # W2ᵀ
            pl.BlockSpec((HIDDEN, 1), lambda i: (0, 0)),          # b2
            pl.BlockSpec((NOUT_PAD, HIDDEN), lambda i: (0, 0)),   # W3ᵀ (row 0 is real)
            pl.BlockSpec((NOUT_PAD, 1), lambda i: (0, 0)),        # b3
        ],
        out_specs=pl.BlockSpec((NOUT_PAD, tb), lambda i: (0, i)),  # lane-dense, unmasked stores
        compiler_params=pltpu.CompilerParams(
            dimension_semantics=("parallel",),   # independent batch tiles
        ),
        cost_estimate=pl.CostEstimate(
            flops=flops, transcendentals=0, bytes_accessed=bytes_accessed),
    )(x_fm, w1_p, b1_p, w2_p, b2_p, w3_p, b3_p)

    # Row 0 holds the value head; padded batch columns are sliced off.
    return out[0, :B].reshape(B, 1)


def critic_reference(x, params, compute_dtype=jnp.float32):
    """Pure-JAX reference; compute_dtype mimics the kernel's MXU input dtype."""
    w1, b1, w2, b2, w3, b3 = params

    def dense(h, w, b):
        return jnp.dot(h.astype(compute_dtype), w.astype(compute_dtype),
                       preferred_element_type=jnp.float32) + b

    h = jnp.maximum(dense(x, w1, b1), 0.0)
    h = jnp.maximum(dense(h, w2, b2), 0.0)
    return dense(h, w3, b3)


if __name__ == "__main__":
    key = jax.random.PRNGKey(0)
    k_p, k_x1, k_x2, k_x3 = jax.random.split(key, 4)

    state_dim = 4  # CartPole observation dim
    params = init_params(k_p, state_dim)

    # ---- f32-weight path (matches PyTorch f32 semantics) ----
    prepped_f32 = prepare_params(params, jnp.float32)

    x_small = jax.random.normal(k_x1, (8, state_dim), jnp.float32)
    out = jax.block_until_ready(critic_forward(x_small, prepped_f32))
    ref = critic_reference(x_small, params)
    assert out.shape == (8, 1), out.shape
    assert jnp.allclose(out, ref, atol=1e-4, rtol=1e-4)

    # Non-multiple-of-128 batch: exercises balanced-tile padding (and 2 tiles on v7x).
    x_mid = jax.random.normal(k_x2, (1000, state_dim), jnp.float32)
    out_mid = jax.block_until_ready(critic_forward(x_mid, prepped_f32))
    ref_mid = critic_reference(x_mid, params)
    assert out_mid.shape == (1000, 1), out_mid.shape
    assert jnp.allclose(out_mid, ref_mid, atol=1e-4, rtol=1e-4)

    # Force a multi-tile "parallel" grid regardless of chip generation.
    x_big = jax.random.normal(k_x3, (300, state_dim), jnp.float32)
    out_big = jax.block_until_ready(critic_forward(x_big, prepped_f32, max_tb=128))
    ref_big = critic_reference(x_big, params)
    assert out_big.shape == (300, 1), out_big.shape
    assert jnp.allclose(out_big, ref_big, atol=1e-4, rtol=1e-4)

    # ---- default bf16 weight/activation path (half the DMA; biggest win on v5e) ----
    prepped_bf16 = prepare_params(params)   # bf16 is now the default
    out_bf16 = jax.block_until_ready(critic_forward(x_small, prepped_bf16))
    ref_bf16 = critic_reference(x_small, params, compute_dtype=jnp.bfloat16)
    assert jnp.allclose(out_bf16, ref_bf16, atol=2e-2, rtol=2e-2)

    # TODO(synk): fuse the actor MLP into this pallas_call (shared x tile, actor/critic W1
    # concatenated along the feature axis to fill the 256-wide MXU, two output refs) to
    # amortize launch + x DMA for a full A2C step.

    print("KERNEL_OK")
</pallas_src>

<mosaic_0001>
module attributes {stable_mosaic.version = 11 : i64} {
  func.func @_critic_kernel(%arg0: i32, %arg1: memref<4x128xf32, #tpu.memory_space<vmem>>, %arg2: memref<128x4xf32, #tpu.memory_space<vmem>>, %arg3: memref<128x1xf32, #tpu.memory_space<vmem>>, %arg4: memref<128x128xf32, #tpu.memory_space<vmem>>, %arg5: memref<128x1xf32, #tpu.memory_space<vmem>>, %arg6: memref<8x128xf32, #tpu.memory_space<vmem>>, %arg7: memref<8x1xf32, #tpu.memory_space<vmem>>, %arg8: memref<8x128xf32, #tpu.memory_space<vmem>>) attributes {dimension_semantics = [#tpu.dimension_semantics<parallel>], iteration_bounds = array<i64: 1>, scalar_prefetch = 0 : i64, scratch_operands = 0 : i64, tpu.core_type = #tpu.core_type<tc>, window_params = [{transform_indices = @transform_0, window_bounds = array<i64: 4, 128>}, {pipeline_mode = #tpu.pipeline_mode<synchronous>, transform_indices = @transform_1, window_bounds = array<i64: 128, 4>}, {pipeline_mode = #tpu.pipeline_mode<synchronous>, transform_indices = @transform_2, window_bounds = array<i64: 128, 1>}, {pipeline_mode = #tpu.pipeline_mode<synchronous>, transform_indices = @transform_3, window_bounds = array<i64: 128, 128>}, {pipeline_mode = #tpu.pipeline_mode<synchronous>, transform_indices = @transform_4, window_bounds = array<i64: 128, 1>}, {pipeline_mode = #tpu.pipeline_mode<synchronous>, transform_indices = @transform_5, window_bounds = array<i64: 8, 128>}, {pipeline_mode = #tpu.pipeline_mode<synchronous>, transform_indices = @transform_6, window_bounds = array<i64: 8, 1>}, {transform_indices = @transform_7, window_bounds = array<i64: 8, 128>}]} {
    %c0 = arith.constant 0 : index
    %c0_0 = arith.constant 0 : index
    %0 = vector.load %arg2[%c0, %c0_0] : memref<128x4xf32, #tpu.memory_space<vmem>>, vector<128x4xf32>
    %c0_1 = arith.constant 0 : index
    %c0_2 = arith.constant 0 : index
    %1 = vector.load %arg1[%c0_1, %c0_2] : memref<4x128xf32, #tpu.memory_space<vmem>>, vector<4x128xf32>
    %cst = arith.constant dense<0.000000e+00> : vector<128x128xf32>
    %2 = tpu.matmul %0, %1, %cst {dimension_numbers = #tpu.dot_dimension_numbers<[1], [0], [0], [1], [0, 0, 1, 1], [], []>} : vector<128x4xf32>, vector<4x128xf32>, vector<128x128xf32> -> vector<128x128xf32>
    %c0_3 = arith.constant 0 : index
    %c0_4 = arith.constant 0 : index
    %3 = vector.load %arg3[%c0_3, %c0_4] : memref<128x1xf32, #tpu.memory_space<vmem>>, vector<128x1xf32>
    %4 = vector.broadcast %3 : vector<128x1xf32> to vector<128x128xf32>
    %5 = arith.addf %2, %4 : vector<128x128xf32>
    %cst_5 = arith.constant 0.000000e+00 : f32
    %6 = vector.broadcast %cst_5 : f32 to vector<128x128xf32>
    %7 = arith.maximumf %5, %6 : vector<128x128xf32>
    %c0_6 = arith.constant 0 : index
    %c0_7 = arith.constant 0 : index
    %8 = vector.load %arg4[%c0_6, %c0_7] : memref<128x128xf32, #tpu.memory_space<vmem>>, vector<128x128xf32>
    %cst_8 = arith.constant dense<0.000000e+00> : vector<128x128xf32>
    %9 = tpu.matmul %8, %7, %cst_8 {dimension_numbers = #tpu.dot_dimension_numbers<[1], [0], [0], [1], [0, 0, 1, 1], [], []>} : vector<128x128xf32>, vector<128x128xf32>, vector<128x128xf32> -> vector<128x128xf32>
    %c0_9 = arith.constant 0 : index
    %c0_10 = arith.constant 0 : index
    %10 = vector.load %arg5[%c0_9, %c0_10] : memref<128x1xf32, #tpu.memory_space<vmem>>, vector<128x1xf32>
    %11 = vector.broadcast %10 : vector<128x1xf32> to vector<128x128xf32>
    %12 = arith.addf %9, %11 : vector<128x128xf32>
    %cst_11 = arith.constant 0.000000e+00 : f32
    %13 = vector.broadcast %cst_11 : f32 to vector<128x128xf32>
    %14 = arith.maximumf %12, %13 : vector<128x128xf32>
    %c0_12 = arith.constant 0 : index
    %c0_13 = arith.constant 0 : index
    %15 = vector.load %arg6[%c0_12, %c0_13] : memref<8x128xf32, #tpu.memory_space<vmem>>, vector<8x128xf32>
    %cst_14 = arith.constant dense<0.000000e+00> : vector<8x128xf32>
    %16 = tpu.matmul %15, %14, %cst_14 {dimension_numbers = #tpu.dot_dimension_numbers<[1], [0], [0], [1], [0, 0, 1, 1], [], []>} : vector<8x128xf32>, vector<128x128xf32>, vector<8x128xf32> -> vector<8x128xf32>
    %c0_15 = arith.constant 0 : index
    %c0_16 = arith.constant 0 : index
    %17 = vector.load %arg7[%c0_15, %c0_16] : memref<8x1xf32, #tpu.memory_space<vmem>>, vector<8x1xf32>
    %18 = vector.broadcast %17 : vector<8x1xf32> to vector<8x128xf32>
    %19 = arith.addf %16, %18 : vector<8x128xf32>
    %c0_17 = arith.constant 0 : index
    %c0_18 = arith.constant 0 : index
    %20 = vector.load %arg8[%c0_17, %c0_18] : memref<8x128xf32, #tpu.memory_space<vmem>>, vector<8x128xf32>
    tpu.vector_store %arg8[%c0_17, %c0_18], %19 {strides = array<i32>} : memref<8x128xf32, #tpu.memory_space<vmem>>, vector<8x128xf32>,
    return
  }
  func.func @transform_0(%arg0: i32) -> (i32, i32) {
    %c0_i32 = arith.constant 0 : i32
    %c0_i32_0 = arith.constant 0 : i32
    return %c0_i32, %arg0 : i32, i32
  }
  func.func @transform_1(%arg0: i32) -> (i32, i32) {
    %c0_i32 = arith.constant 0 : i32
    %c0_i32_0 = arith.constant 0 : i32
    %c0_i32_1 = arith.constant 0 : i32
    return %c0_i32, %c0_i32_0 : i32, i32
  }
  func.func @transform_2(%arg0: i32) -> (i32, i32) {
    %c0_i32 = arith.constant 0 : i32
    %c0_i32_0 = arith.constant 0 : i32
    %c0_i32_1 = arith.constant 0 : i32
    return %c0_i32, %c0_i32_0 : i32, i32
  }
  func.func @transform_3(%arg0: i32) -> (i32, i32) {
    %c0_i32 = arith.constant 0 : i32
    %c0_i32_0 = arith.constant 0 : i32
    %c0_i32_1 = arith.constant 0 : i32
    return %c0_i32, %c0_i32_0 : i32, i32
  }
  func.func @transform_4(%arg0: i32) -> (i32, i32) {
    %c0_i32 = arith.constant 0 : i32
    %c0_i32_0 = arith.constant 0 : i32
    %c0_i32_1 = arith.constant 0 : i32
    return %c0_i32, %c0_i32_0 : i32, i32
  }
  func.func @transform_5(%arg0: i32) -> (i32, i32) {
    %c0_i32 = arith.constant 0 : i32
    %c0_i32_0 = arith.constant 0 : i32
    %c0_i32_1 = arith.constant 0 : i32
    return %c0_i32, %c0_i32_0 : i32, i32
  }
  func.func @transform_6(%arg0: i32) -> (i32, i32) {
    %c0_i32 = arith.constant 0 : i32
    %c0_i32_0 = arith.constant 0 : i32
    %c0_i32_1 = arith.constant 0 : i32
    return %c0_i32, %c0_i32_0 : i32, i32
  }
  func.func @transform_7(%arg0: i32) -> (i32, i32) {
    %c0_i32 = arith.constant 0 : i32
    %c0_i32_0 = arith.constant 0 : i32
    return %c0_i32, %arg0 : i32, i32
  }
}

</mosaic_0001>

<llo_original>
// kernel: critic_forward.1
$region0: #{critic_forward.1}
  #allocation0 [shape = 'u32[]', space=smem, size = 0x4, offset = 0x4, fixed_abs, tag = 'smem constant byte address 0x4 - core index']
  #allocation1 [shape = 'u32[72,128]{1,0:T(1,128)}', space=vmem, size = 0x9000, scoped, tag = 'internal scratch']
  %s0 = inlined_call_operand.vmem [shape: f32[4,128], index: 0, kind: input, shape index: {}]
  %s1 = inlined_call_operand.vmem [shape: f32[128,4], index: 1, kind: input, shape index: {}]
  %s2 = inlined_call_operand.vmem [shape: f32[128,1], index: 2, kind: input, shape index: {}]
  %s3 = inlined_call_operand.vmem [shape: f32[128,128], index: 3, kind: input, shape index: {}]
  %s4 = inlined_call_operand.vmem [shape: f32[128,1], index: 4, kind: input, shape index: {}]
  %s5 = inlined_call_operand.vmem [shape: f32[8,128], index: 5, kind: input, shape index: {}]
  %s6 = inlined_call_operand.vmem [shape: f32[8,1], index: 6, kind: input, shape index: {}]
  %s7 = inlined_call_operand.vmem [shape: f32[8,128], index: 7, kind: output, shape index: {}]
  %s8 = sld [smem:[#allocation0]]
  $region38: #{critic_forward.1} parent=0
    _
  %s10 = ssub.s32 1, %s8
  %s11 = scalar_select 0, %s10, %s8
  // Predicated region
  $region2: #{critic_forward.1} parent=0 // pred_check
    _
  $region3: #{critic_forward.1} parent=0 // pred_check_branch
    %13 = sbr.rel (0) target = $region5
  $region4: #{critic_forward.1} parent=0 // pred_region
    _
  $region5: #{critic_forward.1} parent=0 // pred_fallthru
    _
  // Predicated region
  $region6: #{critic_forward.1} parent=0 // pred_check
    _
  $region7: #{critic_forward.1} parent=0 // pred_check_branch
    %15 = sbr.rel (0) target = $region9
  $region8: #{critic_forward.1} parent=0 // pred_region
    _
  $region9: #{critic_forward.1} parent=0 // pred_fallthru
    _
  // Predicated region
  $region10: #{critic_forward.1} parent=0 // pred_check
    _
  $region11: #{critic_forward.1} parent=0 // pred_check_branch
    %17 = sbr.rel (0) target = $region13
  $region12: #{critic_forward.1} parent=0 // pred_region
    _
  $region13: #{critic_forward.1} parent=0 // pred_fallthru
    _
  // Predicated region
  $region14: #{critic_forward.1} parent=0 // pred_check
    _
  $region15: #{critic_forward.1} parent=0 // pred_check_branch
    %19 = sbr.rel (0) target = $region17
  $region16: #{critic_forward.1} parent=0 // pred_region
    _
  $region17: #{critic_forward.1} parent=0 // pred_fallthru
    _
  // Predicated region
  $region18: #{critic_forward.1} parent=0 // pred_check
    _
  $region19: #{critic_forward.1} parent=0 // pred_check_branch
    %21 = sbr.rel (0) target = $region21
  $region20: #{critic_forward.1} parent=0 // pred_region
    _
  $region21: #{critic_forward.1} parent=0 // pred_fallthru
    _
  // Predicated region
  $region22: #{critic_forward.1} parent=0 // pred_check
    _
  $region23: #{critic_forward.1} parent=0 // pred_check_branch
    %23 = sbr.rel (0) target = $region25
  $region24: #{critic_forward.1} parent=0 // pred_region
    _
  $region25: #{critic_forward.1} parent=0 // pred_fallthru
    _
  // Predicated region
  $region26: #{critic_forward.1} parent=0 // pred_check
    _
  $region27: #{critic_forward.1} parent=0 // pred_check_branch
    %25 = sbr.rel (0) target = $region29
  $region28: #{critic_forward.1} parent=0 // pred_region
    _
  $region29: #{critic_forward.1} parent=0 // pred_fallthru
    _
  %v26 = vld [vmem:[%s1] sm:$0xff]
  %v27 = vld [vmem:[%s1 + $0x8] sm:$0xff]
  %v28 = vld [vmem:[%s1 + $0x10] sm:$0xff]
  %v29 = vld [vmem:[%s1 + $0x18] sm:$0xff]
  %v30 = vld [vmem:[%s1 + $0x20] sm:$0xff]
  %v31 = vld [vmem:[%s1 + $0x28] sm:$0xff]
  %v32 = vld [vmem:[%s1 + $0x30] sm:$0xff]
  %v33 = vld [vmem:[%s1 + $0x38] sm:$0xff]
  %v34 = vld [vmem:[%s1 + $0x40] sm:$0xff]
  %v35 = vld [vmem:[%s1 + $0x48] sm:$0xff]
  %v36 = vld [vmem:[%s1 + $0x50] sm:$0xff]
  %v37 = vld [vmem:[%s1 + $0x58] sm:$0xff]
  %v38 = vld [vmem:[%s1 + $0x60] sm:$0xff]
  %v39 = vld [vmem:[%s1 + $0x68] sm:$0xff]
  %v40 = vld [vmem:[%s1 + $0x70] sm:$0xff]
  %v41 = vld [vmem:[%s1 + $0x78] sm:$0xff]
  %v42 = vld [vmem:[%s0] sm:$0xf]
  %v43 = vld [vmem:[%s2] sm:$0xff]
  %v44 = vld [vmem:[%s2 + $0x8] sm:$0xff]
  %v45 = vld [vmem:[%s2 + $0x10] sm:$0xff]
  %v46 = vld [vmem:[%s2 + $0x18] sm:$0xff]
  %v47 = vld [vmem:[%s2 + $0x20] sm:$0xff]
  %v48 = vld [vmem:[%s2 + $0x28] sm:$0xff]
  %v49 = vld [vmem:[%s2 + $0x30] sm:$0xff]
  %v50 = vld [vmem:[%s2 + $0x38] sm:$0xff]
  %v51 = vld [vmem:[%s2 + $0x40] sm:$0xff]
  %v52 = vld [vmem:[%s2 + $0x48] sm:$0xff]
  %v53 = vld [vmem:[%s2 + $0x50] sm:$0xff]
  %v54 = vld [vmem:[%s2 + $0x58] sm:$0xff]
  %v55 = vld [vmem:[%s2 + $0x60] sm:$0xff]
  %v56 = vld [vmem:[%s2 + $0x68] sm:$0xff]
  %v57 = vld [vmem:[%s2 + $0x70] sm:$0xff]
  %v58 = vld [vmem:[%s2 + $0x78] sm:$0xff]
  %60 = vset.pattern.permute.xlu0 0
  %61 = vperm.xlu0 %60, %v43
  %v62 = vpop.permute.xlu0 %61
  %65 = vset.pattern.permute.xlu0 0
  %66 = vperm.xlu0 %65, %v44
  %v67 = vpop.permute.xlu0 %66
  %70 = vset.pattern.permute.xlu0 0
  %71 = vperm.xlu0 %70, %v45
  %v72 = vpop.permute.xlu0 %71
  %75 = vset.pattern.permute.xlu0 0
  %76 = vperm.xlu0 %75, %v46
  %v77 = vpop.permute.xlu0 %76
  %80 = vset.pattern.permute.xlu0 0
  %81 = vperm.xlu0 %80, %v47
  %v82 = vpop.permute.xlu0 %81
  %85 = vset.pattern.permute.xlu0 0
  %86 = vperm.xlu0 %85, %v48
  %v87 = vpop.permute.xlu0 %86
  %90 = vset.pattern.permute.xlu0 0
  %91 = vperm.xlu0 %90, %v49
  %v92 = vpop.permute.xlu0 %91
  %95 = vset.pattern.permute.xlu0 0
  %96 = vperm.xlu0 %95, %v50
  %v97 = vpop.permute.xlu0 %96
  %100 = vset.pattern.permute.xlu0 0
  %101 = vperm.xlu0 %100, %v51
  %v102 = vpop.permute.xlu0 %101
  %105 = vset.pattern.permute.xlu0 0
  %106 = vperm.xlu0 %105, %v52
  %v107 = vpop.permute.xlu0 %106
  %110 = vset.pattern.permute.xlu0 0
  %111 = vperm.xlu0 %110, %v53
  %v112 = vpop.permute.xlu0 %111
  %115 = vset.pattern.permute.xlu0 0
  %116 = vperm.xlu0 %115, %v54
  %v117 = vpop.permute.xlu0 %116
  %120 = vset.pattern.permute.xlu0 0
  %121 = vperm.xlu0 %120, %v55
  %v122 = vpop.permute.xlu0 %121
  %125 = vset.pattern.permute.xlu0 0
  %126 = vperm.xlu0 %125, %v56
  %v127 = vpop.permute.xlu0 %126
  %130 = vset.pattern.permute.xlu0 0
  %131 = vperm.xlu0 %130, %v57
  %v132 = vpop.permute.xlu0 %131
  %135 = vset.pattern.permute.xlu0 0
  %136 = vperm.xlu0 %135, %v58
  %v137 = vpop.permute.xlu0 %136
  %vm139 = vcmask 31744
  %v141 = vsel %vm139, %v26, 0
  %v144 = vsel %vm139, %v27, 0
  %v147 = vsel %vm139, %v28, 0
  %v150 = vsel %vm139, %v29, 0
  %v153 = vsel %vm139, %v30, 0
  %v156 = vsel %vm139, %v31, 0
  %v159 = vsel %vm139, %v32, 0
  %v162 = vsel %vm139, %v33, 0
  %v165 = vsel %vm139, %v34, 0
  %v168 = vsel %vm139, %v35, 0
  %v171 = vsel %vm139, %v36, 0
  %v174 = vsel %vm139, %v37, 0
  %v177 = vsel %vm139, %v38, 0
  %v180 = vsel %vm139, %v39, 0
  %v183 = vsel %vm139, %v40, 0
  %v186 = vsel %vm139, %v41, 0
  %vm188 = vcmask 1043456
  %v190 = vsel %vm188, %v42, 0
  %192 = vmatpush.msra.mxu0 0.0
  %193 = vmatpush.msra.mxu0 0.0
  %194 = vmatpush.msra.mxu0 0.0
  %195 = vmatpush.msra.mxu0 0.0
  %196 = vmatpush.msra.mxu0 0.0
  %197 = vmatpush.msra.mxu0 0.0
  %198 = vmatpush.msra.mxu0 0.0
  %199 = vmatpush.msra.mxu0 0.0
  %200 = vmatpush.msra.mxu0 0.0
  %201 = vmatpush.msra.mxu0 0.0
  %202 = vmatpush.msra.mxu0 0.0
  %203 = vmatpush.msra.mxu0 0.0
  %204 = vmatpush.msra.mxu0 0.0
  %205 = vmatpush.msra.mxu0 0.0
  %206 = vmatpush.msra.mxu0 0.0
  %207 = vmatpush.msra.mxu0 %v190
  %208 = vmatmul.f32.gmra.mxu0 %v141
  %v209 = vpop.f32.mrf.mxu0
  %v210 = vadd.f32 %v62, %v209
  %211 = vmatmul.f32.gmra.mxu0 %v144
  %v212 = vpop.f32.mrf.mxu0
  %v213 = vadd.f32 %v67, %v212
  %214 = vmatmul.f32.gmra.mxu0 %v147
  %v215 = vpop.f32.mrf.mxu0
  %v216 = vadd.f32 %v72, %v215
  %217 = vmatmul.f32.gmra.mxu0 %v150
  %v218 = vpop.f32.mrf.mxu0
  %v219 = vadd.f32 %v77, %v218
  %220 = vmatmul.f32.gmra.mxu0 %v153
  %v221 = vpop.f32.mrf.mxu0
  %v222 = vadd.f32 %v82, %v221
  %223 = vmatmul.f32.gmra.mxu0 %v156
  %v224 = vpop.f32.mrf.mxu0
  %v225 = vadd.f32 %v87, %v224
  %226 = vmatmul.f32.gmra.mxu0 %v159
  %v227 = vpop.f32.mrf.mxu0
  %v228 = vadd.f32 %v92, %v227
  %229 = vmatmul.f32.gmra.mxu0 %v162
  %v230 = vpop.f32.mrf.mxu0
  %v231 = vadd.f32 %v97, %v230
  %232 = vmatmul.f32.gmra.mxu0 %v165
  %v233 = vpop.f32.mrf.mxu0
  %v234 = vadd.f32 %v102, %v233
  %235 = vmatmul.f32.gmra.mxu0 %v168
  %v236 = vpop.f32.mrf.mxu0
  %v237 = vadd.f32 %v107, %v236
  %238 = vmatmul.f32.gmra.mxu0 %v171
  %v239 = vpop.f32.mrf.mxu0
  %v240 = vadd.f32 %v112, %v239
  %241 = vmatmul.f32.gmra.mxu0 %v174
  %v242 = vpop.f32.mrf.mxu0
  %v243 = vadd.f32 %v117, %v242
  %244 = vmatmul.f32.gmra.mxu0 %v177
  %v245 = vpop.f32.mrf.mxu0
  %v246 = vadd.f32 %v122, %v245
  %247 = vmatmul.f32.gmra.mxu0 %v180
  %v248 = vpop.f32.mrf.mxu0
  %v249 = vadd.f32 %v127, %v248
  %250 = vmatmul.f32.gmra.mxu0 %v183
  %v251 = vpop.f32.mrf.mxu0
  %v252 = vadd.f32 %v132, %v251
  %253 = vmatmul.f32.gmra.mxu0 %v186
  %v254 = vpop.f32.mrf.mxu0
  %v255 = vadd.f32 %v137, %v254
  %256 = vdwg.mxu0
  %v257 = vmax.f32 %v210, 0.0
  %v258 = vmax.f32 %v213, 0.0
  %v259 = vmax.f32 %v216, 0.0
  %v260 = vmax.f32 %v219, 0.0
  %v261 = vmax.f32 %v222, 0.0
  %v262 = vmax.f32 %v225, 0.0
  %v263 = vmax.f32 %v228, 0.0
  %v264 = vmax.f32 %v231, 0.0
  %v265 = vmax.f32 %v234, 0.0
  %v266 = vmax.f32 %v237, 0.0
  %v267 = vmax.f32 %v240, 0.0
  %v268 = vmax.f32 %v243, 0.0
  %v269 = vmax.f32 %v246, 0.0
  %v270 = vmax.f32 %v249, 0.0
  %v271 = vmax.f32 %v252, 0.0
  %v272 = vmax.f32 %v255, 0.0
  %v273 = vld [vmem:[%s3] sm:$0xff]
  %v274 = vld [vmem:[%s3 + $0x8] sm:$0xff]
  %v275 = vld [vmem:[%s3 + $0x10] sm:$0xff]
  %v276 = vld [vmem:[%s3 + $0x18] sm:$0xff]
  %v277 = vld [vmem:[%s3 + $0x20] sm:$0xff]
  %v278 = vld [vmem:[%s3 + $0x28] sm:$0xff]
  %v279 = vld [vmem:[%s3 + $0x30] sm:$0xff]
  %v280 = vld [vmem:[%s3 + $0x38] sm:$0xff]
  %v281 = vld [vmem:[%s3 + $0x40] sm:$0xff]
  %v282 = vld [vmem:[%s3 + $0x48] sm:$0xff]
  %v283 = vld [vmem:[%s3 + $0x50] sm:$0xff]
  %v284 = vld [vmem:[%s3 + $0x58] sm:$0xff]
  %v285 = vld [vmem:[%s3 + $0x60] sm:$0xff]
  %v286 = vld [vmem:[%s3 + $0x68] sm:$0xff]
  %v287 = vld [vmem:[%s3 + $0x70] sm:$0xff]
  %v288 = vld [vmem:[%s3 + $0x78] sm:$0xff]
  %v289 = vld [vmem:[%s4] sm:$0xff]
  %v290 = vld [vmem:[%s4 + $0x8] sm:$0xff]
  %v291 = vld [vmem:[%s4 + $0x10] sm:$0xff]
  %v292 = vld [vmem:[%s4 + $0x18] sm:$0xff]
  %v293 = vld [vmem:[%s4 + $0x20] sm:$0xff]
  %v294 = vld [vmem:[%s4 + $0x28] sm:$0xff]
  %v295 = vld [vmem:[%s4 + $0x30] sm:$0xff]
  %v296 = vld [vmem:[%s4 + $0x38] sm:$0xff]
  %v297 = vld [vmem:[%s4 + $0x40] sm:$0xff]
  %v298 = vld [vmem:[%s4 + $0x48] sm:$0xff]
  %v299 = vld [vmem:[%s4 + $0x50] sm:$0xff]
  %v300 = vld [vmem:[%s4 + $0x58] sm:$0xff]
  %v301 = vld [vmem:[%s4 + $0x60] sm:$0xff]
  %v302 = vld [vmem:[%s4 + $0x68] sm:$0xff]
  %v303 = vld [vmem:[%s4 + $0x70] sm:$0xff]
  %v304 = vld [vmem:[%s4 + $0x78] sm:$0xff]
  %306 = vset.pattern.permute.xlu0 0
  %307 = vperm.xlu0 %306, %v289
  %v308 = vpop.permute.xlu0 %307
  %311 = vset.pattern.permute.xlu0 0
  %312 = vperm.xlu0 %311, %v290
  %v313 = vpop.permute.xlu0 %312
  %316 = vset.pattern.permute.xlu0 0
  %317 = vperm.xlu0 %316, %v291
  %v318 = vpop.permute.xlu0 %317
  %321 = vset.pattern.permute.xlu0 0
  %322 = vperm.xlu0 %321, %v292
  %v323 = vpop.permute.xlu0 %322
  %326 = vset.pattern.permute.xlu0 0
  %327 = vperm.xlu0 %326, %v293
  %v328 = vpop.permute.xlu0 %327
  %331 = vset.pattern.permute.xlu0 0
  %332 = vperm.xlu0 %331, %v294
  %v333 = vpop.permute.xlu0 %332
  %336 = vset.pattern.permute.xlu0 0
  %337 = vperm.xlu0 %336, %v295
  %v338 = vpop.permute.xlu0 %337
  %341 = vset.pattern.permute.xlu0 0
  %342 = vperm.xlu0 %341, %v296
  %v343 = vpop.permute.xlu0 %342
  %346 = vset.pattern.permute.xlu0 0
  %347 = vperm.xlu0 %346, %v297
  %v348 = vpop.permute.xlu0 %347
  %351 = vset.pattern.permute.xlu0 0
  %352 = vperm.xlu0 %351, %v298
  %v353 = vpop.permute.xlu0 %352
  %356 = vset.pattern.permute.xlu0 0
  %357 = vperm.xlu0 %356, %v299
  %v358 = vpop.permute.xlu0 %357
  %361 = vset.pattern.permute.xlu0 0
  %362 = vperm.xlu0 %361, %v300
  %v363 = vpop.permute.xlu0 %362
  %366 = vset.pattern.permute.xlu0 0
  %367 = vperm.xlu0 %366, %v301
  %v368 = vpop.permute.xlu0 %367
  %371 = vset.pattern.permute.xlu0 0
  %372 = vperm.xlu0 %371, %v302
  %v373 = vpop.permute.xlu0 %372
  %376 = vset.pattern.permute.xlu0 0
  %377 = vperm.xlu0 %376, %v303
  %v378 = vpop.permute.xlu0 %377
  %381 = vset.pattern.permute.xlu0 0
  %382 = vperm.xlu0 %381, %v304
  %v383 = vpop.permute.xlu0 %382
  %385 = vmatpush.msra.mxu0 %v272
  %386 = vmatpush.msra.mxu0 %v271
  %387 = vmatpush.msra.mxu0 %v270
  %388 = vmatpush.msra.mxu0 %v269
  %389 = vmatpush.msra.mxu0 %v268
  %390 = vmatpush.msra.mxu0 %v267
  %391 = vmatpush.msra.mxu0 %v266
  %392 = vmatpush.msra.mxu0 %v265
  %393 = vmatpush.msra.mxu0 %v264
  %394 = vmatpush.msra.mxu0 %v263
  %395 = vmatpush.msra.mxu0 %v262
  %396 = vmatpush.msra.mxu0 %v261
  %397 = vmatpush.msra.mxu0 %v260
  %398 = vmatpush.msra.mxu0 %v259
  %399 = vmatpush.msra.mxu0 %v258
  %400 = vmatpush.msra.mxu0 %v257
  %401 = vmatmul.f32.gmra.mxu0 %v273
  %v402 = vpop.f32.mrf.mxu0
  %v403 = vadd.f32 %v308, %v402
  %404 = vmatmul.f32.gmra.mxu0 %v274
  %v405 = vpop.f32.mrf.mxu0
  %v406 = vadd.f32 %v313, %v405
  %407 = vmatmul.f32.gmra.mxu0 %v275
  %v408 = vpop.f32.mrf.mxu0
  %v409 = vadd.f32 %v318, %v408
  %410 = vmatmul.f32.gmra.mxu0 %v276
  %v411 = vpop.f32.mrf.mxu0
  %v412 = vadd.f32 %v323, %v411
  %413 = vmatmul.f32.gmra.mxu0 %v277
  %v414 = vpop.f32.mrf.mxu0
  %v415 = vadd.f32 %v328, %v414
  %416 = vmatmul.f32.gmra.mxu0 %v278
  %v417 = vpop.f32.mrf.mxu0
  %v418 = vadd.f32 %v333, %v417
  %419 = vmatmul.f32.gmra.mxu0 %v279
  %v420 = vpop.f32.mrf.mxu0
  %v421 = vadd.f32 %v338, %v420
  %422 = vmatmul.f32.gmra.mxu0 %v280
  %v423 = vpop.f32.mrf.mxu0
  %v424 = vadd.f32 %v343, %v423
  %425 = vmatmul.f32.gmra.mxu0 %v281
  %v426 = vpop.f32.mrf.mxu0
  %v427 = vadd.f32 %v348, %v426
  %428 = vmatmul.f32.gmra.mxu0 %v282
  %v429 = vpop.f32.mrf.mxu0
  %v430 = vadd.f32 %v353, %v429
  %431 = vmatmul.f32.gmra.mxu0 %v283
  %v432 = vpop.f32.mrf.mxu0
  %v433 = vadd.f32 %v358, %v432
  %434 = vmatmul.f32.gmra.mxu0 %v284
  %v435 = vpop.f32.mrf.mxu0
  %v436 = vadd.f32 %v363, %v435
  %437 = vmatmul.f32.gmra.mxu0 %v285
  %v438 = vpop.f32.mrf.mxu0
  %v439 = vadd.f32 %v368, %v438
  %440 = vmatmul.f32.gmra.mxu0 %v286
  %v441 = vpop.f32.mrf.mxu0
  %v442 = vadd.f32 %v373, %v441
  %443 = vmatmul.f32.gmra.mxu0 %v287
  %v444 = vpop.f32.mrf.mxu0
  %v445 = vadd.f32 %v378, %v444
  %446 = vmatmul.f32.gmra.mxu0 %v288
  %v447 = vpop.f32.mrf.mxu0
  %v448 = vadd.f32 %v383, %v447
  %449 = vdwg.mxu0
  %v450 = vmax.f32 %v403, 0.0
  %v451 = vmax.f32 %v406, 0.0
  %v452 = vmax.f32 %v409, 0.0
  %v453 = vmax.f32 %v412, 0.0
  %v454 = vmax.f32 %v415, 0.0
  %v455 = vmax.f32 %v418, 0.0
  %v456 = vmax.f32 %v421, 0.0
  %v457 = vmax.f32 %v424, 0.0
  %v458 = vmax.f32 %v427, 0.0
  %v459 = vmax.f32 %v430, 0.0
  %v460 = vmax.f32 %v433, 0.0
  %v461 = vmax.f32 %v436, 0.0
  %v462 = vmax.f32 %v439, 0.0
  %v463 = vmax.f32 %v442, 0.0
  %v464 = vmax.f32 %v445, 0.0
  %v465 = vmax.f32 %v448, 0.0
  %v466 = vld [vmem:[%s5] sm:$0xff]
  %v467 = vld [vmem:[%s6] sm:$0xff]
  %469 = vset.pattern.permute.xlu0 0
  %470 = vperm.xlu0 %469, %v467
  %v471 = vpop.permute.xlu0 %470
  %473 = vmatpush.msra.mxu0 %v465
  %474 = vmatpush.msra.mxu0 %v464
  %475 = vmatpush.msra.mxu0 %v463
  %476 = vmatpush.msra.mxu0 %v462
  %477 = vmatpush.msra.mxu0 %v461
  %478 = vmatpush.msra.mxu0 %v460
  %479 = vmatpush.msra.mxu0 %v459
  %480 = vmatpush.msra.mxu0 %v458
  %481 = vmatpush.msra.mxu0 %v457
  %482 = vmatpush.msra.mxu0 %v456
  %483 = vmatpush.msra.mxu0 %v455
  %484 = vmatpush.msra.mxu0 %v454
  %485 = vmatpush.msra.mxu0 %v453
  %486 = vmatpush.msra.mxu0 %v452
  %487 = vmatpush.msra.mxu0 %v451
  %488 = vmatpush.msra.mxu0 %v450
  %489 = vmatmul.f32.gmra.mxu0 %v466
  %v490 = vpop.f32.mrf.mxu0
  %v491 = vadd.f32 %v471, %v490
  %492 = vdwg.mxu0
  %493 = vst [vmem:[%s7] sm:$0xff] %v491
  // Predicated region
  $region30: #{critic_forward.1} parent=0 // pred_check
    _
  $region31: #{critic_forward.1} parent=0 // pred_check_branch
    %495 = sbr.rel (0) target = $region33
  $region32: #{critic_forward.1} parent=0 // pred_region
    _
  $region33: #{critic_forward.1} parent=0 // pred_fallthru
    _
  // Predicated region
  $region34: #{critic_forward.1} parent=0 // pred_check
    _
  $region35: #{critic_forward.1} parent=0 // pred_check_branch
    %497 = sbr.rel (0) target = $region37
  $region36: #{critic_forward.1} parent=0 // pred_region
    _
  $region37: #{critic_forward.1} parent=0 // pred_fallthru
    _

</llo_original>
